<compile_context>
chip_gen: v6e
topology: v6e:2x2x1
jax: 0.10.0
libtpu: 0.0.40
codegen_flags: <defaults>
</compile_context>

<pallas_src>
import jax
import jax.numpy as jnp
from jax import lax
from jax.experimental import pallas as pl
from jax.experimental.pallas import tpu as pltpu


def _linear22_vpu_kernel(w_ref, b_ref, x_ref, o_ref):
    """out = x @ W^T + b for in_features = out_features = 2, on the VPU.

    w_ref: (2, 2) f32 in SMEM (PyTorch layout: (out_f, in_f))
    b_ref: (2,)   f32 in SMEM
    x_ref: (TB, 2) f32 in VMEM
    o_ref: (TB, 2) f32 in VMEM
    """
    x = x_ref[...]
    x0 = x[:, 0:1]                      # (TB, 1), lane-broadcast below
    x1 = x[:, 1:2]

    # Build the two rows of W^T (and the bias row) broadcast across the tile
    # from SMEM scalars via a lane select: pure VALU work, no MXU push/pop,
    # no wrapper-side transpose or reshape. Everything stays f32 (v5e-safe).
    lane = lax.broadcasted_iota(jnp.int32, o_ref.shape, 1)    # 0 / 1 along out_f
    is0 = lane == 0
    wt_row0 = jnp.where(is0, w_ref[0, 0], w_ref[1, 0])        # [W00, W10]
    wt_row1 = jnp.where(is0, w_ref[0, 1], w_ref[1, 1])        # [W01, W11]
    b_row = jnp.where(is0, b_ref[0], b_ref[1])                # [b0,  b1 ]

    o_ref[...] = (x0 * wt_row0 + x1 * wt_row1 + b_row).astype(o_ref.dtype)


def sexnet_forward(x, weight, bias, *, block_b=1024):
    """Pallas implementation of sexnet.forward: a single nn.Linear(2, 2).

    x:      (B, 2) float32
    weight: (2, 2) float32, PyTorch convention (out_features, in_features)
    bias:   (2,)   float32
    """
    B, in_f = x.shape
    out_f, in_f_w = weight.shape
    assert (in_f, out_f, in_f_w) == (2, 2, 2), "sexnet is a Linear(2, 2)"
    assert bias.shape == (out_f,)

    # Batch tiling: one grid step per `tb` rows, marked "parallel" so large
    # batches shard across TensorCores (v7x megacore). weight/bias are whole-
    # array SMEM residents across all grid steps. tb is either the full batch
    # or a multiple of 8, satisfying the (8, 128) block rule; the last dims
    # (2) equal the full array dims.
    tb = B if B <= block_b else block_b
    grid_b = pl.cdiv(B, tb)
    b_pad = grid_b * tb
    x_in = x if b_pad == B else jnp.pad(x, ((0, b_pad - B), (0, 0)))

    bytes_accessed = 4 * (b_pad * in_f + out_f * in_f + out_f + b_pad * out_f)
    out = pl.pallas_call(
        _linear22_vpu_kernel,
        out_shape=jax.ShapeDtypeStruct((b_pad, out_f), x.dtype),
        grid=(grid_b,),
        in_specs=[
            pl.BlockSpec(memory_space=pltpu.MemorySpace.SMEM),   # weight (2,2)
            pl.BlockSpec(memory_space=pltpu.MemorySpace.SMEM),   # bias (2,)
            pl.BlockSpec((tb, in_f), lambda i: (i, 0),
                         memory_space=pltpu.MemorySpace.VMEM),   # x tile
        ],
        out_specs=pl.BlockSpec((tb, out_f), lambda i: (i, 0),
                               memory_space=pltpu.MemorySpace.VMEM),
        compiler_params=pltpu.CompilerParams(
            dimension_semantics=("parallel",)),
        cost_estimate=pl.CostEstimate(
            flops=2 * b_pad * in_f * out_f + b_pad * out_f,
            transcendentals=0,
            bytes_accessed=bytes_accessed),
    )(weight, bias, x_in)
    return out if b_pad == B else out[:B]


if __name__ == "__main__":
    key = jax.random.PRNGKey(0)
    kx, kw, kb = jax.random.split(key, 3)

    B, IN, OUT = 8, 2, 2
    x = jax.random.normal(kx, (B, IN), dtype=jnp.float32)
    # Deterministic "PyTorch-like" init: uniform(-1/sqrt(in), 1/sqrt(in))
    bound = 1.0 / (IN ** 0.5)
    weight = jax.random.uniform(kw, (OUT, IN), minval=-bound, maxval=bound,
                                dtype=jnp.float32)
    bias = jax.random.uniform(kb, (OUT,), minval=-bound, maxval=bound,
                              dtype=jnp.float32)

    out = sexnet_forward(x, weight, bias)
    jax.block_until_ready(out)

    # Reference check against plain JAX (same semantics as torch.nn.Linear)
    ref = x @ weight.T + bias
    assert out.shape == (B, OUT)
    assert jnp.allclose(out, ref, atol=1e-5, rtol=1e-5), "mismatch vs reference"

    print("KERNEL_OK")
</pallas_src>

<mosaic_0001>
module attributes {stable_mosaic.version = 11 : i64} {
  func.func @_linear22_vpu_kernel(%arg0: i32, %arg1: memref<2x2xf32, #tpu.memory_space<smem>>, %arg2: memref<2xf32, #tpu.memory_space<smem>>, %arg3: memref<8x2xf32, #tpu.memory_space<vmem>>, %arg4: memref<8x2xf32, #tpu.memory_space<vmem>>) attributes {dimension_semantics = [#tpu.dimension_semantics<parallel>], iteration_bounds = array<i64: 1>, scalar_prefetch = 0 : i64, scratch_operands = 0 : i64, tpu.core_type = #tpu.core_type<tc>, window_params = [{transform_indices = @transform_0, window_bounds = array<i64: 2, 2>}, {transform_indices = @transform_1, window_bounds = array<i64: 2>}, {transform_indices = @transform_2, window_bounds = array<i64: 8, 2>}, {transform_indices = @transform_3, window_bounds = array<i64: 8, 2>}]} {
    %c0 = arith.constant 0 : index
    %c0_0 = arith.constant 0 : index
    %0 = vector.load %arg3[%c0, %c0_0] : memref<8x2xf32, #tpu.memory_space<vmem>>, vector<8x2xf32>
    %1 = vector.extract_strided_slice %0 {offsets = [0, 0], sizes = [8, 1], strides = [1, 1]} : vector<8x2xf32> to vector<8x1xf32>
    %2 = vector.extract_strided_slice %0 {offsets = [0, 1], sizes = [8, 1], strides = [1, 1]} : vector<8x2xf32> to vector<8x1xf32>
    %3 = tpu.iota {dimensions = array<i32: 1>} : vector<8x2xi32>
    %c0_i32 = arith.constant 0 : i32
    %4 = vector.broadcast %c0_i32 : i32 to vector<8x2xi32>
    %5 = arith.cmpi eq, %3, %4 : vector<8x2xi32>
    %c0_1 = arith.constant 0 : index
    %c0_2 = arith.constant 0 : index
    %6 = memref.load %arg1[%c0_1, %c0_2] : memref<2x2xf32, #tpu.memory_space<smem>>
    %c1 = arith.constant 1 : index
    %c0_3 = arith.constant 0 : index
    %7 = memref.load %arg1[%c1, %c0_3] : memref<2x2xf32, #tpu.memory_space<smem>>
    %8 = vector.broadcast %6 : f32 to vector<8x2xf32>
    %9 = vector.broadcast %7 : f32 to vector<8x2xf32>
    %10 = arith.select %5, %8, %9 : vector<8x2xi1>, vector<8x2xf32>
    %c0_4 = arith.constant 0 : index
    %c1_5 = arith.constant 1 : index
    %11 = memref.load %arg1[%c0_4, %c1_5] : memref<2x2xf32, #tpu.memory_space<smem>>
    %c1_6 = arith.constant 1 : index
    %c1_7 = arith.constant 1 : index
    %12 = memref.load %arg1[%c1_6, %c1_7] : memref<2x2xf32, #tpu.memory_space<smem>>
    %13 = vector.broadcast %11 : f32 to vector<8x2xf32>
    %14 = vector.broadcast %12 : f32 to vector<8x2xf32>
    %15 = arith.select %5, %13, %14 : vector<8x2xi1>, vector<8x2xf32>
    %c0_8 = arith.constant 0 : index
    %16 = memref.load %arg2[%c0_8] : memref<2xf32, #tpu.memory_space<smem>>
    %c1_9 = arith.constant 1 : index
    %17 = memref.load %arg2[%c1_9] : memref<2xf32, #tpu.memory_space<smem>>
    %18 = vector.broadcast %16 : f32 to vector<8x2xf32>
    %19 = vector.broadcast %17 : f32 to vector<8x2xf32>
    %20 = arith.select %5, %18, %19 : vector<8x2xi1>, vector<8x2xf32>
    %21 = vector.broadcast %1 : vector<8x1xf32> to vector<8x2xf32>
    %22 = arith.mulf %21, %10 : vector<8x2xf32>
    %23 = vector.broadcast %2 : vector<8x1xf32> to vector<8x2xf32>
    %24 = arith.mulf %23, %15 : vector<8x2xf32>
    %25 = arith.addf %22, %24 : vector<8x2xf32>
    %26 = arith.addf %25, %20 : vector<8x2xf32>
    %c0_10 = arith.constant 0 : index
    %c0_11 = arith.constant 0 : index
    %27 = vector.load %arg4[%c0_10, %c0_11] : memref<8x2xf32, #tpu.memory_space<vmem>>, vector<8x2xf32>
    tpu.vector_store %arg4[%c0_10, %c0_11], %26 {strides = array<i32>} : memref<8x2xf32, #tpu.memory_space<vmem>>, vector<8x2xf32>,
    return
  }
  func.func @transform_0(%arg0: i32) -> (i32, i32) {
    %c0_i32 = arith.constant 0 : i32
    %c0_i32_0 = arith.constant 0 : i32
    %c0_i32_1 = arith.constant 0 : i32
    return %c0_i32, %c0_i32_0 : i32, i32
  }
  func.func @transform_1(%arg0: i32) -> i32 {
    %c0_i32 = arith.constant 0 : i32
    %c0_i32_0 = arith.constant 0 : i32
    return %c0_i32 : i32
  }
  func.func @transform_2(%arg0: i32) -> (i32, i32) {
    %c0_i32 = arith.constant 0 : i32
    %c0_i32_0 = arith.constant 0 : i32
    return %arg0, %c0_i32 : i32, i32
  }
  func.func @transform_3(%arg0: i32) -> (i32, i32) {
    %c0_i32 = arith.constant 0 : i32
    %c0_i32_0 = arith.constant 0 : i32
    return %arg0, %c0_i32 : i32, i32
  }
}

</mosaic_0001>

<llo_original>
// kernel: tpu_custom_call.1
$region0: #{tpu_custom_call.1}
  #allocation0 [shape = 'u32[]', space=smem, size = 0x4, offset = 0x4, fixed_abs, tag = 'smem constant byte address 0x4 - core index']
  #allocation1 [shape = 'u32[144,128]{1,0:T(1,128)}', space=vmem, size = 0x12000, scoped, tag = 'internal scratch']
  %s0 = inlined_call_operand.vmem [shape: f32[2,2], index: 0, kind: input, shape index: {}]
  %s1 = inlined_call_operand.vmem [shape: f32[2], index: 1, kind: input, shape index: {}]
  %s2 = inlined_call_operand.vmem [shape: f32[8,2], index: 2, kind: input, shape index: {}]
  %s3 = inlined_call_operand.vmem [shape: f32[8,2], index: 3, kind: output, shape index: {}]
  %s4 = sld [smem:[#allocation0]]
  $region30: #{tpu_custom_call.1} parent=0
    _
  %s6 = ssub.s32 1, %s4
  %s7 = scalar_select 0, %s6, %s4
  $region1: #{tpu_custom_call.1} parent=0
    #allocation2 [shape = 'u8[1024]{0}', space=smem, size = 0x400, scoped, tag = 'input window, operand 0, single buffered']
    #allocation3 [shape = 's32[1]{0}', space=sflag, size = 0x4, scoped, tag = 'scoped memory for tpu_custom_call.1']
    #allocation4 [shape = 'u8[512]{0}', space=smem, size = 0x200, scoped, tag = 'input window, operand 1, single buffered']
    #allocation5 [shape = 's32[1]{0}', space=sflag, size = 0x4, scoped, tag = 'scoped memory for tpu_custom_call.1']
    %8 = vsyncpa [#allocation3], 0
    %9 = vsyncpa [#allocation5], 0
    // Predicated region
    $region2: #{tpu_custom_call.1} parent=1 // pred_check
      _
    $region3: #{tpu_custom_call.1} parent=1 // pred_check_branch
      %11 = sbr.rel (0) target = $region5
    $region4: #{tpu_custom_call.1} parent=1 // pred_region
      %s13 = ssub.s32 32, 32
      %14 = vsyncadd [#allocation3], %s13
      %s16 = sshll.u32 %s0, 4
      %s17 = int_to_ptr.vmem [resolvable:$true] %s16
      %19 = dma.vmem_to_smem %s17, 32, [#allocation2], [#allocation3]
    $region5: #{tpu_custom_call.1} parent=1 // pred_fallthru
      _
    // Predicated region
    $region6: #{tpu_custom_call.1} parent=1 // pred_check
      _
    $region7: #{tpu_custom_call.1} parent=1 // pred_check_branch
      %21 = sbr.rel (0) target = $region9
    $region8: #{tpu_custom_call.1} parent=1 // pred_region
      %s23 = ssub.s32 16, 16
      %24 = vsyncadd [#allocation5], %s23
      %s26 = sshll.u32 %s1, 4
      %s27 = int_to_ptr.vmem [resolvable:$true] %s26
      %29 = dma.vmem_to_smem %s27, 16, [#allocation4], [#allocation5]
    $region9: #{tpu_custom_call.1} parent=1 // pred_fallthru
      _
    // Predicated region
    $region10: #{tpu_custom_call.1} parent=1 // pred_check
      _
    $region11: #{tpu_custom_call.1} parent=1 // pred_check_branch
      %31 = sbr.rel (0) target = $region13
    $region12: #{tpu_custom_call.1} parent=1 // pred_region
      _
    $region13: #{tpu_custom_call.1} parent=1 // pred_fallthru
      _
    // Predicated region
    $region14: #{tpu_custom_call.1} parent=1 // pred_check
      _
    $region15: #{tpu_custom_call.1} parent=1 // pred_check_branch
      %33 = sbr.rel (0) target = $region17
    $region16: #{tpu_custom_call.1} parent=1 // pred_region
      %34 = dma.done [#allocation3], 32
    $region17: #{tpu_custom_call.1} parent=1 // pred_fallthru
      _
    // Predicated region
    $region18: #{tpu_custom_call.1} parent=1 // pred_check
      _
    $region19: #{tpu_custom_call.1} parent=1 // pred_check_branch
      %36 = sbr.rel (0) target = $region21
    $region20: #{tpu_custom_call.1} parent=1 // pred_region
      %37 = dma.done [#allocation5], 16
    $region21: #{tpu_custom_call.1} parent=1 // pred_fallthru
      _
    %38 = sfence
    %v39 = vld [vmem:[%s2] sm:$0xff]
    %v40 = vlaneseq
    %v41 = vand.u32 %v40, 127
    %vm42 = vcmp.eq.s32.totalorder %v41, 0
    %s43 = sld [smem:[#allocation2]]
    %s44 = sld [smem:[#allocation2 + $0x80]]
    %v45 = vstv %s43
    %v46 = vstv %s44
    %v47 = vsel %vm42, %v45, %v46
    %s48 = sld [smem:[#allocation2 + $0x1]]
    %s49 = sld [smem:[#allocation2 + $0x81]]
    %v50 = vstv %s48
    %v51 = vstv %s49
    %v52 = vsel %vm42, %v50, %v51
    %s53 = sld [smem:[#allocation4]]
    %s54 = sld [smem:[#allocation4 + $0x1]]
    %v55 = vstv %s53
    %v56 = vstv %s54
    %v57 = vsel %vm42, %v55, %v56
    %59 = vset.pattern.permute.xlu0 0
    %60 = vperm.xlu0 %59, %v39
    %v61 = vpop.permute.xlu0 %60
    %v63 = vmul.f32 %v61, %v47
    %64 = vset.pattern.permute.xlu0 1
    %65 = vperm.xlu0 %64, %v39
    %v66 = vpop.permute.xlu0 %65
    %v68 = vmul.f32 %v66, %v52
    %v69 = vadd.f32 %v63, %v68
    %v70 = vadd.f32 %v69, %v57
    %vm71 = vcmask 15360
    %72 = vst.msk [vmem:[%s3] sm:$0xff] %vm71, %v70
    // Predicated region
    $region22: #{tpu_custom_call.1} parent=1 // pred_check
      _
    $region23: #{tpu_custom_call.1} parent=1 // pred_check_branch
      %74 = sbr.rel (0) target = $region25
    $region24: #{tpu_custom_call.1} parent=1 // pred_region
      _
    $region25: #{tpu_custom_call.1} parent=1 // pred_fallthru
      _
    // Predicated region
    $region26: #{tpu_custom_call.1} parent=1 // pred_check
      _
    $region27: #{tpu_custom_call.1} parent=1 // pred_check_branch
      %76 = sbr.rel (0) target = $region29
    $region28: #{tpu_custom_call.1} parent=1 // pred_region
      _
    $region29: #{tpu_custom_call.1} parent=1 // pred_fallthru
      _
    %77 = vsyncpa [#allocation3], 1
    %78 = vsyncpa [#allocation5], 1

</llo_original>
